<compile_context>
chip_gen: v5e
topology: v5e:2x2
jax: 0.10.0
libtpu: 0.0.40
codegen_flags: <defaults>
</compile_context>

<pallas_src>
import functools

import jax
import jax.numpy as jnp
from jax import lax
from jax.experimental import pallas as pl
from jax.experimental.pallas import tpu as pltpu


def _center_loss_kernel(x_ref, labels_ref, centers_ref, out_ref,
                        num_acc, den_acc, *, batch_size):
    b = pl.program_id(1)                       # batch-tile (reduction) axis

    x = x_ref[...]                             # (TB, D)  f32
    lab = labels_ref[...]                      # (TB, TC) f32
    c = centers_ref[...]                       # (TC, D)  f32

    @pl.when(b == 0)
    def _init():
        # term3: B * ||c_i||^2, constant across batch tiles -> add once.
        csq = jnp.sum(c * c, axis=1).reshape(1, -1)              # (1, TC)
        num_acc[...] = jnp.float32(batch_size) * csq
        den_acc[...] = jnp.zeros_like(den_acc)

    # G[b, i] = x_b . c_i : one MXU matmul per (class tile, batch tile).
    g = lax.dot_general(x, c, (((1,), (1,)), ((), ())),
                        preferred_element_type=jnp.float32)      # (TB, TC)
    xsq = jnp.sum(x * x, axis=1, keepdims=True)                  # (TB, 1)

    # Accumulate per-class partials (lane-dense (1, TC) vectors).
    num_acc[...] += jnp.sum(lab * lab * xsq - 2.0 * lab * g,
                            axis=0, keepdims=True)
    den_acc[...] += jnp.sum(lab, axis=0, keepdims=True)

    @pl.when(b == pl.num_programs(1) - 1)
    def _finalize():
        # Single vectorized divide over the class tile; one unmasked store.
        out_ref[...] = num_acc[...] / (den_acc[...] + jnp.float32(1e-8))


def multi_label_center_loss(x, labels, centers, *, tm=None, tc=None):
    """Pallas forward of MultiLabelCenterLoss. Returns a scalar f32 loss."""
    B, D = x.shape
    C, D2 = centers.shape
    assert D == D2 and labels.shape == (B, C)

    # Batch tile: <=512 rows keeps double-buffered (TB, D) f32 blocks small
    # enough for v7x's 64 MiB VMEM; class tiles are lane-dense (256) when big.
    if tm is None:
        tm = B if B <= 512 else 512
    if tc is None:
        tc = C if C <= 256 else 256

    Bp = pl.cdiv(B, tm) * tm
    Cp = pl.cdiv(C, tc) * tc

    xf = x.astype(jnp.float32)
    lf = labels.astype(jnp.float32)
    cf = centers.astype(jnp.float32)
    # Zero padding is exact: padded rows/classes contribute 0 to both the
    # numerator and denominator accumulators (term3 uses the true batch size).
    if Bp != B:
        xf = jnp.pad(xf, ((0, Bp - B), (0, 0)))
        lf = jnp.pad(lf, ((0, Bp - B), (0, 0)))
    if Cp != C:
        lf = jnp.pad(lf, ((0, 0), (0, Cp - C)))
        cf = jnp.pad(cf, ((0, Cp - C), (0, 0)))

    grid = (Cp // tc, Bp // tm)   # (class tiles [parallel], batch tiles [reduce])

    kernel = functools.partial(_center_loss_kernel, batch_size=B)
    per_class = pl.pallas_call(
        kernel,
        out_shape=jax.ShapeDtypeStruct((1, Cp), jnp.float32),
        grid_spec=pltpu.PrefetchScalarGridSpec(
            num_scalar_prefetch=0,
            grid=grid,
            in_specs=[
                pl.BlockSpec((tm, D), lambda ci, bi: (bi, 0)),    # x
                pl.BlockSpec((tm, tc), lambda ci, bi: (bi, ci)),  # labels
                pl.BlockSpec((tc, D), lambda ci, bi: (ci, 0)),    # centers row tile
            ],
            out_specs=pl.BlockSpec((1, tc), lambda ci, bi: (0, ci)),
            scratch_shapes=[
                pltpu.VMEM((1, tc), jnp.float32),   # per-class numerator partials
                pltpu.VMEM((1, tc), jnp.float32),   # per-class label-count partials
            ],
        ),
        compiler_params=pltpu.CompilerParams(
            dimension_semantics=("parallel", "arbitrary"),
        ),
    )(xf, lf, cf)

    # Tiny final reduction + /B done in the wrapper on the lane-dense output.
    return jnp.sum(per_class[0, :C]) / jnp.float32(B)


def reference_loss(x, labels, centers):
    """Pure-JAX mirror of the PyTorch forward (for verification)."""
    B = x.shape[0]
    loss = jnp.float32(0.0)
    for i in range(centers.shape[0]):
        class_mask = labels[:, i:i + 1]
        class_features = x * class_mask
        class_center = centers[i:i + 1]
        distance = (class_features - class_center) ** 2
        loss = loss + distance.sum() / (class_mask.sum() + 1e-8)
    return loss / B


if __name__ == "__main__":
    key = jax.random.PRNGKey(0)

    configs = [
        # (batch, num_classes, feat_dim, batch_tile)
        (16, 4, 128, 8),     # multi batch-tile accumulation path
        (8, 6, 256, None),   # single grid step, non-pow2 class count
        (10, 4, 128, 8),     # batch-padding path
    ]
    for (B, C, D, tm) in configs:
        key, k_x, k_lbl, k_ctr = jax.random.split(key, 4)
        x = jax.random.normal(k_x, (B, D), dtype=jnp.float32)
        labels = (jax.random.uniform(k_lbl, (B, C)) > 0.5).astype(jnp.float32)
        # Deterministic stand-in for nn.Parameter(torch.randn(num_classes, feat_dim)).
        centers = jax.random.normal(k_ctr, (C, D), dtype=jnp.float32)

        loss = multi_label_center_loss(x, labels, centers, tm=tm)
        jax.block_until_ready(loss)

        ref = reference_loss(x, labels, centers)
        assert jnp.allclose(loss, ref, rtol=1e-4, atol=1e-4), (B, C, D, loss, ref)

    print("KERNEL_OK")
</pallas_src>

<mosaic_0001>
module attributes {stable_mosaic.version = 11 : i64} {
  func.func @_center_loss_kernel(%arg0: i32, %arg1: i32, %arg2: memref<8x128xf32, #tpu.memory_space<vmem>>, %arg3: memref<8x4xf32, #tpu.memory_space<vmem>>, %arg4: memref<4x128xf32, #tpu.memory_space<vmem>>, %arg5: memref<1x4xf32, #tpu.memory_space<vmem>>, %arg6: memref<1x4xf32, #tpu.memory_space<vmem>>, %arg7: memref<1x4xf32, #tpu.memory_space<vmem>>) attributes {dimension_semantics = [#tpu.dimension_semantics<parallel>, #tpu.dimension_semantics<arbitrary>], iteration_bounds = array<i64: 1, 2>, scalar_prefetch = 0 : i64, scratch_operands = 2 : i64, tpu.core_type = #tpu.core_type<tc>, window_params = [{transform_indices = @transform_0, window_bounds = array<i64: 8, 128>}, {transform_indices = @transform_1, window_bounds = array<i64: 8, 4>}, {transform_indices = @transform_2, window_bounds = array<i64: 4, 128>}, {transform_indices = @transform_3, window_bounds = array<i64: 1, 4>}]} {
    %c0 = arith.constant 0 : index
    %c0_0 = arith.constant 0 : index
    %0 = vector.load %arg2[%c0, %c0_0] : memref<8x128xf32, #tpu.memory_space<vmem>>, vector<8x128xf32>
    %c0_1 = arith.constant 0 : index
    %c0_2 = arith.constant 0 : index
    %1 = vector.load %arg3[%c0_1, %c0_2] : memref<8x4xf32, #tpu.memory_space<vmem>>, vector<8x4xf32>
    %c0_3 = arith.constant 0 : index
    %c0_4 = arith.constant 0 : index
    %2 = vector.load %arg4[%c0_3, %c0_4] : memref<4x128xf32, #tpu.memory_space<vmem>>, vector<4x128xf32>
    %c0_i32 = arith.constant 0 : i32
    %3 = arith.cmpi eq, %arg1, %c0_i32 : i32
    %4 = arith.extui %3 : i1 to i32
    %c0_i32_5 = arith.constant 0 : i32
    %5 = arith.cmpi ne, %4, %c0_i32_5 : i32
    scf.if %5 {
      %30 = arith.mulf %2, %2 : vector<4x128xf32>
      %cst_19 = arith.constant dense<0.000000e+00> : vector<4xf32>
      %31 = vector.multi_reduction <add>, %30, %cst_19 [1] : vector<4x128xf32> to vector<4xf32>
      %32 = vector.shape_cast %31 : vector<4xf32> to vector<1x4xf32>
      %cst_20 = arith.constant 1.600000e+01 : f32
      %33 = vector.broadcast %cst_20 : f32 to vector<1x4xf32>
      %34 = arith.mulf %33, %32 : vector<1x4xf32>
      %c0_21 = arith.constant 0 : index
      %c0_22 = arith.constant 0 : index
      %35 = vector.load %arg6[%c0_21, %c0_22] : memref<1x4xf32, #tpu.memory_space<vmem>>, vector<1x4xf32>
      tpu.vector_store %arg6[%c0_21, %c0_22], %34 {strides = array<i32>} : memref<1x4xf32, #tpu.memory_space<vmem>>, vector<1x4xf32>,
      %cst_23 = arith.constant 0.000000e+00 : f32
      %36 = vector.broadcast %cst_23 : f32 to vector<1x4xf32>
      %c0_24 = arith.constant 0 : index
      %c0_25 = arith.constant 0 : index
      %37 = vector.load %arg7[%c0_24, %c0_25] : memref<1x4xf32, #tpu.memory_space<vmem>>, vector<1x4xf32>
      tpu.vector_store %arg7[%c0_24, %c0_25], %36 {strides = array<i32>} : memref<1x4xf32, #tpu.memory_space<vmem>>, vector<1x4xf32>,
    } else {
    }
    %cst = arith.constant dense<0.000000e+00> : vector<8x4xf32>
    %6 = tpu.matmul %0, %2, %cst {dimension_numbers = #tpu.dot_dimension_numbers<[1], [1], [0], [0], [0, 0, 1, 0], [], []>} : vector<8x128xf32>, vector<4x128xf32>, vector<8x4xf32> -> vector<8x4xf32>
    %7 = arith.mulf %0, %0 : vector<8x128xf32>
    %cst_6 = arith.constant dense<0.000000e+00> : vector<8xf32>
    %8 = vector.multi_reduction <add>, %7, %cst_6 [1] : vector<8x128xf32> to vector<8xf32>
    %9 = vector.shape_cast %8 : vector<8xf32> to vector<8x1xf32>
    %c0_7 = arith.constant 0 : index
    %c0_8 = arith.constant 0 : index
    %10 = vector.load %arg6[%c0_7, %c0_8] : memref<1x4xf32, #tpu.memory_space<vmem>>, vector<1x4xf32>
    %11 = arith.mulf %1, %1 : vector<8x4xf32>
    %12 = vector.broadcast %9 : vector<8x1xf32> to vector<8x4xf32>
    %13 = arith.mulf %11, %12 : vector<8x4xf32>
    %cst_9 = arith.constant 2.000000e+00 : f32
    %14 = vector.broadcast %cst_9 : f32 to vector<8x4xf32>
    %15 = arith.mulf %14, %1 : vector<8x4xf32>
    %16 = arith.mulf %15, %6 : vector<8x4xf32>
    %17 = arith.subf %13, %16 : vector<8x4xf32>
    %cst_10 = arith.constant dense<0.000000e+00> : vector<4xf32>
    %18 = vector.multi_reduction <add>, %17, %cst_10 [0] : vector<8x4xf32> to vector<4xf32>
    %19 = vector.shape_cast %18 : vector<4xf32> to vector<1x4xf32>
    %20 = arith.addf %10, %19 : vector<1x4xf32>
    %c0_11 = arith.constant 0 : index
    %c0_12 = arith.constant 0 : index
    %21 = vector.load %arg6[%c0_11, %c0_12] : memref<1x4xf32, #tpu.memory_space<vmem>>, vector<1x4xf32>
    tpu.vector_store %arg6[%c0_11, %c0_12], %20 {strides = array<i32>} : memref<1x4xf32, #tpu.memory_space<vmem>>, vector<1x4xf32>,
    %c0_13 = arith.constant 0 : index
    %c0_14 = arith.constant 0 : index
    %22 = vector.load %arg7[%c0_13, %c0_14] : memref<1x4xf32, #tpu.memory_space<vmem>>, vector<1x4xf32>
    %cst_15 = arith.constant dense<0.000000e+00> : vector<4xf32>
    %23 = vector.multi_reduction <add>, %1, %cst_15 [0] : vector<8x4xf32> to vector<4xf32>
    %24 = vector.shape_cast %23 : vector<4xf32> to vector<1x4xf32>
    %25 = arith.addf %22, %24 : vector<1x4xf32>
    %c0_16 = arith.constant 0 : index
    %c0_17 = arith.constant 0 : index
    %26 = vector.load %arg7[%c0_16, %c0_17] : memref<1x4xf32, #tpu.memory_space<vmem>>, vector<1x4xf32>
    tpu.vector_store %arg7[%c0_16, %c0_17], %25 {strides = array<i32>} : memref<1x4xf32, #tpu.memory_space<vmem>>, vector<1x4xf32>,
    %c1_i32 = arith.constant 1 : i32
    %27 = arith.cmpi eq, %arg1, %c1_i32 : i32
    %28 = arith.extui %27 : i1 to i32
    %c0_i32_18 = arith.constant 0 : i32
    %29 = arith.cmpi ne, %28, %c0_i32_18 : i32
    scf.if %29 {
      %c0_19 = arith.constant 0 : index
      %c0_20 = arith.constant 0 : index
      %30 = vector.load %arg6[%c0_19, %c0_20] : memref<1x4xf32, #tpu.memory_space<vmem>>, vector<1x4xf32>
      %c0_21 = arith.constant 0 : index
      %c0_22 = arith.constant 0 : index
      %31 = vector.load %arg7[%c0_21, %c0_22] : memref<1x4xf32, #tpu.memory_space<vmem>>, vector<1x4xf32>
      %cst_23 = arith.constant 9.99999993E-9 : f32
      %32 = vector.broadcast %cst_23 : f32 to vector<1x4xf32>
      %33 = arith.addf %31, %32 : vector<1x4xf32>
      %34 = arith.divf %30, %33 : vector<1x4xf32>
      %c0_24 = arith.constant 0 : index
      %c0_25 = arith.constant 0 : index
      %35 = vector.load %arg5[%c0_24, %c0_25] : memref<1x4xf32, #tpu.memory_space<vmem>>, vector<1x4xf32>
      tpu.vector_store %arg5[%c0_24, %c0_25], %34 {strides = array<i32>} : memref<1x4xf32, #tpu.memory_space<vmem>>, vector<1x4xf32>,
    } else {
    }
    return
  }
  func.func @transform_0(%arg0: i32, %arg1: i32) -> (i32, i32) {
    %c0_i32 = arith.constant 0 : i32
    %c0_i32_0 = arith.constant 0 : i32
    return %arg1, %c0_i32 : i32, i32
  }
  func.func @transform_1(%arg0: i32, %arg1: i32) -> (i32, i32) {
    %c0_i32 = arith.constant 0 : i32
    return %arg1, %arg0 : i32, i32
  }
  func.func @transform_2(%arg0: i32, %arg1: i32) -> (i32, i32) {
    %c0_i32 = arith.constant 0 : i32
    %c0_i32_0 = arith.constant 0 : i32
    return %arg0, %c0_i32 : i32, i32
  }
  func.func @transform_3(%arg0: i32, %arg1: i32) -> (i32, i32) {
    %c0_i32 = arith.constant 0 : i32
    %c0_i32_0 = arith.constant 0 : i32
    return %c0_i32, %arg0 : i32, i32
  }
}

</mosaic_0001>

<llo_original>
// kernel: tpu_custom_call.1
$region0: #{tpu_custom_call.1}
  #allocation0 [shape = 'u32[]', space=smem, size = 0x4, offset = 0x4, fixed_abs, tag = 'smem constant byte address 0x4 - core index']
  #allocation1 [shape = 'u32[72,128]{1,0:T(1,128)}', space=vmem, size = 0x9000, scoped, tag = 'internal scratch']
  #allocation2 [shape = 'f32[1,4]{1,0:T(1,128)}', space=vmem, size = 0x200, scoped, tag = 'scratch operand']
  #allocation3 [shape = 'f32[1,4]{1,0:T(1,128)}', space=vmem, size = 0x200, scoped, tag = 'scratch operand']
  %s0 = inlined_call_operand.vmem [shape: f32[16,128], index: 0, kind: input, shape index: {}]
  %s1 = inlined_call_operand.vmem [shape: f32[16,4], index: 1, kind: input, shape index: {}]
  %s2 = inlined_call_operand.vmem [shape: f32[4,128], index: 2, kind: input, shape index: {}]
  %s3 = inlined_call_operand.hbm [shape: f32[1,4], index: 3, kind: output, shape index: {}]
  %s4 = sld [smem:[#allocation0]]
  $region53: #{tpu_custom_call.1} parent=0
    _
  %s6 = ssub.s32 1, %s4
  %s7 = scalar_select 0, %s6, %s4
  $region1: #{tpu_custom_call.1} parent=0
    #allocation4 [shape = 'u8[512]{0}', space=vmem, size = 0x400, scoped, tag = 'output window, operand 0, single buffered']
    #allocation5 [shape = 's32[2]{0}', space=sflag, size = 0x8, scoped, tag = 'scoped memory for tpu_custom_call.1']
    %8 = vsyncpa [#allocation5], 0
    loop: start=0, step=1, limit=4
    $region2: #{tpu_custom_call.1} parent=1 // loop_pre_header
      _
    $region3: #{tpu_custom_call.1} parent=1 // loop_header
      %s10 = sphi 0, %s14
      %p11 = scmp.ge.s32.totalorder %s10, 4
      %s17 = sphi 0, %s29
      %s18 = sphi 0, %s25
      %s19 = sphi 0, %s17
      %s20 = sphi 0, %s18
      %s21 = sphi 0, %s19
      %s22 = sphi 0, %s20
      %s32 = sphi 0, %s34
      %s35 = sphi 0, %s32
      %s36 = sphi 0, %s35
      %s52 = sphi 0, %s36
      %s60 = sphi 0, %s62
      %s63 = sphi 0, %s60
      %s64 = sphi 0, %s63
      %s80 = sphi 0, %s64
      %s86 = sphi 0, %s88
      %s89 = sphi 0, %s86
      %s90 = sphi 0, %s89
      %s106 = sphi 0, %s90
      %s112 = sphi 0, %s114
      %s115 = sphi 0, %s112
      %s116 = sphi 0, %s115
      %s132 = sphi 0, %s116
    $region4: #{tpu_custom_call.1} parent=1 // loop_header_branch
      %13 = sbr.rel (%p11) target = $region8
    $region5: #{tpu_custom_call.1} parent=1 // loop_body
      %s15 = ssub.s32 %s10, 1
      %s16 = ssub.s32 %s10, 2
      %s23 = sadd.s32 1, %s18
      %p24 = scmp.ge.s32.totalorder %s23, 2
      %s25 = scalar_select %p24, 0, %s23
      %s26 = sadd.s32 1, %s17
      %s27 = scalar_select %p24, %s26, %s17
      %p28 = scmp.ge.s32.totalorder %s27, 1
      %s29 = scalar_select %p28, 0, %s27
      %s30 = ssub.s32 %s18, %s25
      %p31 = scmp.eq.s32.totalorder %s30, 0
      %s33 = sadd.s32 %s32, 1
      %s34 = scalar_select %p31, %s32, %s33
      %p37 = pneg %p31
      %p38 = scmp.eq.s32.totalorder %s10, 1
      %p39 = por %p37, %p38
      %p40 = scmp.ne.s32.totalorder %s32, %s35
      %p41 = scmp.eq.s32.totalorder %s10, 0
      %p42 = por %p40, %p41
      %p43 = scmp.ne.s32.totalorder %s32, %s35
      %p44 = scmp.eq.s32.totalorder %s15, 1
      %p45 = por %p43, %p44
      %p46 = scmp.ne.s32.totalorder %s35, %s36
      %p47 = scmp.eq.s32.totalorder %s15, 0
      %p48 = por %p46, %p47
      %p49 = scmp.ne.s32.totalorder %s35, %s36
      %p50 = scmp.eq.s32.totalorder %s16, 1
      %p51 = por %p49, %p50
      %p53 = scmp.ne.s32.totalorder %s36, %s52
      %p54 = scmp.eq.s32.totalorder %s16, 0
      %p55 = por %p53, %p54
      %s56 = ssub.s32 %s18, %s25
      %s57 = ssub.s32 %s17, %s29
      %s58 = sor.u32 %s56, %s57
      %p59 = scmp.eq.s32.totalorder %s58, 0
      %s61 = sadd.s32 %s60, 1
      %s62 = scalar_select %p59, %s60, %s61
      %p65 = pneg %p59
      %p66 = scmp.eq.s32.totalorder %s10, 1
      %p67 = por %p65, %p66
      %p68 = scmp.ne.s32.totalorder %s60, %s63
      %p69 = scmp.eq.s32.totalorder %s10, 0
      %p70 = por %p68, %p69
      %p71 = scmp.ne.s32.totalorder %s60, %s63
      %p72 = scmp.eq.s32.totalorder %s15, 1
      %p73 = por %p71, %p72
      %p74 = scmp.ne.s32.totalorder %s63, %s64
      %p75 = scmp.eq.s32.totalorder %s15, 0
      %p76 = por %p74, %p75
      %p77 = scmp.ne.s32.totalorder %s63, %s64
      %p78 = scmp.eq.s32.totalorder %s16, 1
      %p79 = por %p77, %p78
      %p81 = scmp.ne.s32.totalorder %s64, %s80
      %p82 = scmp.eq.s32.totalorder %s16, 0
      %p83 = por %p81, %p82
      %s84 = ssub.s32 %s17, %s29
      %p85 = scmp.eq.s32.totalorder %s84, 0
      %s87 = sadd.s32 %s86, 1
      %s88 = scalar_select %p85, %s86, %s87
      %p91 = pneg %p85
      %p92 = scmp.eq.s32.totalorder %s10, 1
      %p93 = por %p91, %p92
      %p94 = scmp.ne.s32.totalorder %s86, %s89
      %p95 = scmp.eq.s32.totalorder %s10, 0
      %p96 = por %p94, %p95
      %p97 = scmp.ne.s32.totalorder %s86, %s89
      %p98 = scmp.eq.s32.totalorder %s15, 1
      %p99 = por %p97, %p98
      %p100 = scmp.ne.s32.totalorder %s89, %s90
      %p101 = scmp.eq.s32.totalorder %s15, 0
      %p102 = por %p100, %p101
      %p103 = scmp.ne.s32.totalorder %s89, %s90
      %p104 = scmp.eq.s32.totalorder %s16, 1
      %p105 = por %p103, %p104
      %p107 = scmp.ne.s32.totalorder %s90, %s106
      %p108 = scmp.eq.s32.totalorder %s16, 0
      %p109 = por %p107, %p108
      %s110 = ssub.s32 %s17, %s29
      %p111 = scmp.eq.s32.totalorder %s110, 0
      %s113 = sadd.s32 %s112, 1
      %s114 = scalar_select %p111, %s112, %s113
      %p117 = pneg %p111
      %p118 = scmp.eq.s32.totalorder %s10, 1
      %p119 = por %p117, %p118
      %p120 = scmp.ne.s32.totalorder %s112, %s115
      %p121 = scmp.eq.s32.totalorder %s10, 0
      %p122 = por %p120, %p121
      %p123 = scmp.ne.s32.totalorder %s112, %s115
      %p124 = scmp.eq.s32.totalorder %s15, 1
      %p125 = por %p123, %p124
      %p126 = scmp.ne.s32.totalorder %s115, %s116
      %p127 = scmp.eq.s32.totalorder %s15, 0
      %p128 = por %p126, %p127
      %p129 = scmp.ne.s32.totalorder %s115, %s116
      %p130 = scmp.eq.s32.totalorder %s16, 1
      %p131 = por %p129, %p130
      %p133 = scmp.ne.s32.totalorder %s116, %s132
      %p134 = scmp.eq.s32.totalorder %s16, 0
      %p135 = por %p133, %p134
      %p136 = scmp.le.s32.totalorder 1, %s10
      %p137 = scmp.lt.s32.totalorder %s10, 3
      %p138 = pnand %p136, %p137
      %p139 = pneg %p138
      // Predicated region
      $region9: #{tpu_custom_call.1} parent=5 // pred_check
        _
      $region10: #{tpu_custom_call.1} parent=5 // pred_check_branch
        %141 = sbr.rel (%p138) target = $region12
      $region11: #{tpu_custom_call.1} parent=5 // pred_region
        %s142 = ssub.s32 %s10, 1
        // Predicated region
        $region13: #{tpu_custom_call.1} parent=11 // pred_check
          %p143 = pneg %p102
        $region14: #{tpu_custom_call.1} parent=11 // pred_check_branch
          %145 = sbr.rel (%p143) target = $region16
        $region15: #{tpu_custom_call.1} parent=11 // pred_region
          %p146 = scmp.lt.s32.totalorder %s19, 0
          %s147 = scalar_select %p146, %s19, 0
          %s148 = smul.addr %s147, 4
          %s149 = scalar_lea.vmem %s2, %s148
        $region16: #{tpu_custom_call.1} parent=11 // pred_fallthru
          _
      $region12: #{tpu_custom_call.1} parent=5 // pred_fallthru
        _
      %p150 = scmp.lt.s32.totalorder %s10, 2
      // Predicated region
      $region17: #{tpu_custom_call.1} parent=5 // pred_check
        %p151 = pneg %p150
      $region18: #{tpu_custom_call.1} parent=5 // pred_check_branch
        %153 = sbr.rel (%p151) target = $region20
      $region19: #{tpu_custom_call.1} parent=5 // pred_region
        // Predicated region
        $region21: #{tpu_custom_call.1} parent=19 // pred_check
          %p154 = pneg %p42
        $region22: #{tpu_custom_call.1} parent=19 // pred_check_branch
          %156 = sbr.rel (%p154) target = $region24
        $region23: #{tpu_custom_call.1} parent=19 // pred_region
          %p157 = scmp.lt.s32.totalorder %s18, 1
          %s158 = scalar_select %p157, %s18, 1
          %s159 = smul.addr %s158, 8
          %s160 = scalar_lea.vmem %s0, %s159
        $region24: #{tpu_custom_call.1} parent=19 // pred_fallthru
          _
        // Predicated region
        $region25: #{tpu_custom_call.1} parent=19 // pred_check
          %p161 = pneg %p70
        $region26: #{tpu_custom_call.1} parent=19 // pred_check_branch
          %163 = sbr.rel (%p161) target = $region28
        $region27: #{tpu_custom_call.1} parent=19 // pred_region
          %p164 = scmp.lt.s32.totalorder %s18, 1
          %s165 = scalar_select %p164, %s18, 1
          %p166 = scmp.lt.s32.totalorder %s17, 0
          %s167 = scalar_select %p166, %s17, 0
          %s168 = sadd.s32 %s167, %s165
          %s169 = smul.addr %s168, 8
          %s170 = scalar_lea.vmem %s1, %s169
        $region28: #{tpu_custom_call.1} parent=19 // pred_fallthru
          _
      $region20: #{tpu_custom_call.1} parent=5 // pred_fallthru
        _
      %p171 = scmp.le.s32.totalorder 1, %s10
      %p172 = scmp.lt.s32.totalorder %s10, 3
      %p173 = pnand %p171, %p172
      %p174 = pneg %p173
      // Predicated region
      $region29: #{tpu_custom_call.1} parent=5 // pred_check
        _
      $region30: #{tpu_custom_call.1} parent=5 // pred_check_branch
        %176 = sbr.rel (%p173) target = $region32
      $region31: #{tpu_custom_call.1} parent=5 // pred_region
        %s177 = ssub.s32 %s10, 1
        %p178 = scmp.lt.s32.totalorder %s20, 1
        %s179 = scalar_select %p178, %s20, 1
        %s180 = smul.addr %s179, 8
        %s181 = scalar_lea.vmem %s0, %s180
        %p182 = pneg %p48
        %p183 = pneg %p45
        %p184 = scmp.lt.s32.totalorder %s20, 1
        %s185 = scalar_select %p184, %s20, 1
        %p186 = scmp.lt.s32.totalorder %s19, 0
        %s187 = scalar_select %p186, %s19, 0
        %s188 = sadd.s32 %s187, %s185
        %s189 = smul.addr %s188, 8
        %s190 = scalar_lea.vmem %s1, %s189
        %p191 = pneg %p76
        %p192 = pneg %p73
        %p193 = scmp.lt.s32.totalorder %s19, 0
        %s194 = scalar_select %p193, %s19, 0
        %s195 = smul.addr %s194, 4
        %s196 = scalar_lea.vmem %s2, %s195
        %p197 = pneg %p102
        %p198 = pneg %p99
        %p199 = pneg %p128
        %p200 = pneg %p125
        %p201 = scmp.lt.s32.totalorder %s20, 1
        %s202 = scalar_select %p201, %s20, 1
        %s203 = smul.addr %s202, 8
        %s204 = scalar_lea.vmem %s0, %s203
        %p205 = scmp.lt.s32.totalorder %s20, 1
        %s206 = scalar_select %p205, %s20, 1
        %p207 = scmp.lt.s32.totalorder %s19, 0
        %s208 = scalar_select %p207, %s19, 0
        %s209 = sadd.s32 %s208, %s206
        %s210 = smul.addr %s209, 8
        %s211 = scalar_lea.vmem %s1, %s210
        %p212 = scmp.lt.s32.totalorder %s19, 0
        %s213 = scalar_select %p212, %s19, 0
        %s214 = smul.addr %s213, 4
        %s215 = scalar_lea.vmem %s2, %s214
        %v216 = vld [vmem:[%s204] sm:$0xff]
        %v217 = vld [vmem:[%s211] sm:$0xff]
        %v218 = vld [vmem:[%s215] sm:$0xf]
        %p219 = scmp.eq.s32.totalorder %s20, 0
        // Predicated region
        $region33: #{tpu_custom_call.1} parent=31 // pred_check
          %p220 = pneg %p219
        $region34: #{tpu_custom_call.1} parent=31 // pred_check_branch
          %222 = sbr.rel (%p220) target = $region36
        $region35: #{tpu_custom_call.1} parent=31 // pred_region
          %v223 = vmul.f32 %v218, %v218
          %vm224 = vcmask 1043456
          %v225 = vsel %vm224, %v223, 0.0
          %226 = vadd.xlane.f32.xlu0 %v225
          %v227 = vpop.xlane.xlu0 %226
          %v228 = vmul.f32 %v227, 16.0
          %v230 = vlaneseq
          %v231 = vand.u32 %v230, 127
          %v232 = vperm.slane %v228, %v231
          %vm234 = vcmask 24576
          %235 = vst.msk [vmem:[#allocation2] sm:$0x1] %vm234, %v232
          %236 = vst.msk [vmem:[#allocation3] sm:$0x1] %vm234, 0.0
        $region36: #{tpu_custom_call.1} parent=31 // pred_fallthru
          _
        %237 = vmatpush.xpose.msra.mxu0 0.0
        %238 = vmatpush.xpose.msra.mxu0 0.0
        %239 = vmatpush.xpose.msra.mxu0 0.0
        %240 = vmatpush.xpose.msra.mxu0 0.0
        %241 = vmatpush.xpose.msra.mxu0 0.0
        %242 = vmatpush.xpose.msra.mxu0 0.0
        %243 = vmatpush.xpose.msra.mxu0 0.0
        %244 = vmatpush.xpose.msra.mxu0 0.0
        %245 = vmatpush.xpose.msra.mxu0 0.0
        %246 = vmatpush.xpose.msra.mxu0 0.0
        %247 = vmatpush.xpose.msra.mxu0 0.0
        %248 = vmatpush.xpose.msra.mxu0 0.0
        %249 = vmatpush.xpose.msra.mxu0 0.0
        %250 = vmatpush.xpose.msra.mxu0 0.0
        %251 = vmatpush.xpose.msra.mxu0 0.0
        %252 = vmatpush.xpose.msra.mxu0 %v218
        %253 = vmatmul.f32.gmra.mxu0 %v216
        %v254 = vpop.f32.mrf.mxu0
        %v255 = vadd.f32 0.0, %v254
        %256 = vdwg.mxu0
        %v257 = vmul.f32 %v216, %v216
        %258 = vadd.xlane.f32.xlu0 %v257
        %v259 = vpop.xlane.xlu0 %258
        %v260 = vld [vmem:[#allocation2] sm:$0x1]
        %v261 = vmul.f32 %v217, %v217
        %v262 = vmul.f32 %v261, %v259
        %v263 = vmul.f32 %v217, 2.0
        %v264 = vmul.f32 %v263, %v255
        %v265 = vsub.f32 %v262, %v264
        %vm266 = vcmask 31744
        %v267 = vsel %vm266, %v265, 0.0
        %v268 = vrot.slane %v267, 4
        %v269 = vadd.f32 %v267, %v268
        %v270 = vrot.slane %v269, 2
        %v271 = vadd.f32 %v269, %v270
        %v272 = vrot.slane %v271, 1
        %v273 = vadd.f32 %v271, %v272
        %v274 = vadd.f32 %v260, %v273
        %vm275 = vcmask 24576
        %276 = vst.msk [vmem:[#allocation2] sm:$0x1] %vm275, %v274
        %v277 = vld [vmem:[#allocation3] sm:$0x1]
        %v278 = vsel %vm266, %v217, 0.0
        %v279 = vrot.slane %v278, 4
        %v280 = vadd.f32 %v278, %v279
        %v281 = vrot.slane %v280, 2
        %v282 = vadd.f32 %v280, %v281
        %v283 = vrot.slane %v282, 1
        %v284 = vadd.f32 %v282, %v283
        %v285 = vadd.f32 %v277, %v284
        %286 = vst.msk [vmem:[#allocation3] sm:$0x1] %vm275, %v285
        %p287 = scmp.eq.s32.totalorder %s20, 1
        // Predicated region
        $region37: #{tpu_custom_call.1} parent=31 // pred_check
          %p288 = pneg %p287
        $region38: #{tpu_custom_call.1} parent=31 // pred_check_branch
          %290 = sbr.rel (%p288) target = $region40
        $region39: #{tpu_custom_call.1} parent=31 // pred_region
          %v291 = vld [vmem:[#allocation2] sm:$0x1]
          %v292 = vld [vmem:[#allocation3] sm:$0x1]
          %v293 = vadd.f32 %v292, 1e-08
          %v294 = vrcp.pop %v293
          %v295 = vmul.f32 %v293, %v294
          %v296 = vsub.f32 1.0, %v295
          %v297 = vmul.f32 %v294, %v296
          %v298 = vadd.f32 %v294, %v297
          %vm299 = vweird.f32 %v293
          %vm300 = vweird.f32 %v294
          %vm301 = vmor %vm299, %vm300
          %v302 = vsel %vm301, %v294, %v298
          %v303 = vand.u32 2147483647, %v293
          %vm304 = vcmp.eq.f32.partialorder %v303, 8.507059e+37
          %v305 = vand.u32 %v293, 2147483648
          %v306 = vor.u32 1.1754944e-38, %v305
          %v307 = vsel %vm304, %v306, %v302
          %v308 = vmul.f32 %v291, %v307
          %309 = vst.msk [vmem:[#allocation4] sm:$0x1] %vm275, %v308
        $region40: #{tpu_custom_call.1} parent=31 // pred_fallthru
          _
        // Predicated region
        $region41: #{tpu_custom_call.1} parent=31 // pred_check
          %p310 = pneg %p125
        $region42: #{tpu_custom_call.1} parent=31 // pred_check_branch
          %312 = sbr.rel (%p310) target = $region44
        $region43: #{tpu_custom_call.1} parent=31 // pred_region
          %314 = vsyncadd [#allocation5], 0
          %s315 = scalar_lea.hbm %s3, %s19
          %s317 = sshll.u32 [#allocation4], 4
          %s318 = int_to_ptr.vmem [resolvable:$true] %s317
          %s319 = sshll.u32 %s315, 4
          %s320 = int_to_ptr.hbm [resolvable:$true] %s319
          %322 = dma.vmem_to_hbm [thread:$0]  %s318, 16, %s320, [#allocation5]
        $region44: #{tpu_custom_call.1} parent=31 // pred_fallthru
          _
        // Predicated region
        $region45: #{tpu_custom_call.1} parent=31 // pred_check
          %p323 = pneg %p125
        $region46: #{tpu_custom_call.1} parent=31 // pred_check_branch
          %325 = sbr.rel (%p323) target = $region48
        $region47: #{tpu_custom_call.1} parent=31 // pred_region
          %327 = dma.done [#allocation5], 16
        $region48: #{tpu_custom_call.1} parent=31 // pred_fallthru
          _
      $region32: #{tpu_custom_call.1} parent=5 // pred_fallthru
        _
      %p328 = scmp.le.s32.totalorder 2, %s10
      // Predicated region
      $region49: #{tpu_custom_call.1} parent=5 // pred_check
        %p329 = pneg %p328
      $region50: #{tpu_custom_call.1} parent=5 // pred_check_branch
        %331 = sbr.rel (%p329) target = $region52
      $region51: #{tpu_custom_call.1} parent=5 // pred_region
        %s332 = ssub.s32 %s10, 2
      $region52: #{tpu_custom_call.1} parent=5 // pred_fallthru
        _
    $region6: #{tpu_custom_call.1} parent=1 // loop_footer
      %s14 = sadd.s32 1, %s10
    $region7: #{tpu_custom_call.1} parent=1 // loop_footer_branch
      %9 = sbr.rel target = $region3
    $region8: #{tpu_custom_call.1} parent=1 // loop_exit
      _
    %333 = vsyncpa [#allocation5], 1
    %s334 = scalar_lea.sflag [#allocation5], 1
    %335 = vsyncpa %s334, 1

</llo_original>
